<compile_context>
chip_gen: v7x
topology: tpu7x:2x2x1
jax: 0.10.0
libtpu: 0.0.40
codegen_flags: <defaults>
</compile_context>

<pallas_src>
import functools

import jax
import jax.numpy as jnp
from jax.experimental import pallas as pl
from jax.experimental.pallas import tpu as pltpu


def _round_up(x, m):
    return ((x + m - 1) // m) * m


def _make_hypernet_kernel(num_layers):
    """Kernel over one batch tile: x @ W0 -> ReLU -> ... -> @ W_{L-1}."""

    def kernel(*refs):
        # refs = (x_ref, w0_ref, ..., w{L-1}_ref, o_ref)
        x_ref = refs[0]
        w_refs = refs[1 : 1 + num_layers]
        o_ref = refs[1 + num_layers]

        h = x_ref[...]
        for li in range(num_layers):
            h = jnp.dot(h, w_refs[li][...], preferred_element_type=jnp.float32)
            if li != num_layers - 1:  # ReLU after every layer except the last
                h = jnp.maximum(h, 0.0)
        o_ref[...] = h.astype(o_ref.dtype)

    return kernel


def hypernet_forward(x, weights_t, *, max_batch_tile=256):
    """x: (B, in_size); weights_t: list of (fan_in, fan_out) matrices.

    Returns (B, out_size) = reference MLP forward (ReLU between all but last).
    """
    B, in_size = x.shape
    out_size = weights_t[-1].shape[1]
    num_layers = len(weights_t)

    # ---- pad feature dims to 128 lanes, batch to a sublane/tile multiple ----
    in_p = _round_up(in_size, 128)
    out_p = _round_up(out_size, 128)

    tile_b = min(max_batch_tile, _round_up(B, 8))
    b_pad = _round_up(B, tile_b)

    x_p = x
    if (b_pad, in_p) != (B, in_size):
        x_p = jnp.pad(x, ((0, b_pad - B), (0, in_p - in_size)))

    padded_w = []
    for w in weights_t:
        fi, fo = w.shape
        fi_p = _round_up(fi, 128)
        fo_p = _round_up(fo, 128)
        if (fi_p, fo_p) != (fi, fo):
            w = jnp.pad(w, ((0, fi_p - fi), (0, fo_p - fo)))
        padded_w.append(w)

    kernel = _make_hypernet_kernel(num_layers)

    grid = (b_pad // tile_b,)

    # x tile moves along the batch grid axis; weights use a constant block
    # index so they stay resident in VMEM across grid steps.
    in_specs = [pl.BlockSpec((tile_b, in_p), lambda i: (i, 0))]
    for w in padded_w:
        in_specs.append(pl.BlockSpec(w.shape, lambda i: (0, 0)))
    out_spec = pl.BlockSpec((tile_b, out_p), lambda i: (i, 0))

    flops = 2 * b_pad * sum(w.shape[0] * w.shape[1] for w in padded_w)
    bytes_accessed = (
        x_p.size * x_p.dtype.itemsize
        + sum(w.size * w.dtype.itemsize for w in padded_w)
        + b_pad * out_p * x.dtype.itemsize
    )
    cost = pl.CostEstimate(
        flops=flops, transcendentals=0, bytes_accessed=bytes_accessed
    )

    out_padded = pl.pallas_call(
        kernel,
        out_shape=jax.ShapeDtypeStruct((b_pad, out_p), x.dtype),
        grid=grid,
        in_specs=in_specs,
        out_specs=out_spec,
        compiler_params=pltpu.CompilerParams(
            dimension_semantics=("parallel",),
            vmem_limit_bytes=64 << 20,
        ),
        cost_estimate=cost,
    )(x_p, *padded_w)

    # Padded weight rows/cols are zero, so padded output columns are exactly
    # zero; just slice back to the true shape.
    return out_padded[:B, :out_size]


def init_hypernet_params(key, in_size, hidden_size, out_size, num_hidden_layers=1):
    """Kaiming-normal (fan_in, relu gain) init matching
    nn.init.kaiming_normal_(weight, nonlinearity='relu'). Weights are returned
    already transposed to (fan_in, fan_out) so the kernel computes x @ W."""
    dims = [(in_size, hidden_size)]
    for _ in range(num_hidden_layers):
        dims.append((hidden_size, hidden_size))
    dims.append((hidden_size, out_size))

    weights_t = []
    for (fan_in, fan_out) in dims:
        key, sub = jax.random.split(key)
        std = (2.0 / fan_in) ** 0.5  # gain=sqrt(2) for relu, fan_in mode
        # PyTorch weight is (fan_out, fan_in); we store the transpose directly.
        w_t = std * jax.random.normal(sub, (fan_in, fan_out), dtype=jnp.float32)
        weights_t.append(w_t)
    return weights_t


def hypernet_reference(x, weights_t):
    h = x
    for i, w in enumerate(weights_t):
        h = h @ w
        if i != len(weights_t) - 1:
            h = jnp.maximum(h, 0.0)
    return h


if __name__ == "__main__":
    key = jax.random.PRNGKey(0)
    k_x, k_w = jax.random.split(key)

    # Small shapes consistent with the module: x is (batch, in_size).
    B, in_size, hidden_size, out_size = 8, 32, 64, 32
    num_hidden_layers = 1

    x = jax.random.normal(k_x, (B, in_size), dtype=jnp.float32)
    weights_t = init_hypernet_params(
        k_w, in_size, hidden_size, out_size, num_hidden_layers=num_hidden_layers
    )

    out = hypernet_forward(x, weights_t)
    out = jax.block_until_ready(out)

    ref = hypernet_reference(x, weights_t)
    assert out.shape == (B, out_size)
    assert jnp.allclose(out, ref, atol=1e-5, rtol=1e-5), "mismatch vs reference"

    # Also exercise a larger batch so the grid actually has >1 step (pipelined
    # tiles, resident weights) and check correctness there too.
    k_x2, _ = jax.random.split(k_x)
    x_big = jax.random.normal(k_x2, (600, in_size), dtype=jnp.float32)
    out_big = jax.block_until_ready(hypernet_forward(x_big, weights_t))
    ref_big = hypernet_reference(x_big, weights_t)
    assert out_big.shape == (600, out_size)
    assert jnp.allclose(out_big, ref_big, atol=1e-4, rtol=1e-4), "mismatch (big batch)"

    print("KERNEL_OK")
</pallas_src>

<mosaic_0001>
module attributes {stable_mosaic.version = 11 : i64} {
  func.func @kernel(%arg0: i32, %arg1: memref<8x128xf32, #tpu.memory_space<vmem>>, %arg2: memref<128x128xf32, #tpu.memory_space<vmem>>, %arg3: memref<128x128xf32, #tpu.memory_space<vmem>>, %arg4: memref<128x128xf32, #tpu.memory_space<vmem>>, %arg5: memref<8x128xf32, #tpu.memory_space<vmem>>) attributes {dimension_semantics = [#tpu.dimension_semantics<parallel>], iteration_bounds = array<i64: 1>, scalar_prefetch = 0 : i64, scratch_operands = 0 : i64, tpu.core_type = #tpu.core_type<tc>, window_params = [{transform_indices = @transform_0, window_bounds = array<i64: 8, 128>}, {pipeline_mode = #tpu.pipeline_mode<synchronous>, transform_indices = @transform_1, window_bounds = array<i64: 128, 128>}, {pipeline_mode = #tpu.pipeline_mode<synchronous>, transform_indices = @transform_2, window_bounds = array<i64: 128, 128>}, {pipeline_mode = #tpu.pipeline_mode<synchronous>, transform_indices = @transform_3, window_bounds = array<i64: 128, 128>}, {transform_indices = @transform_4, window_bounds = array<i64: 8, 128>}]} {
    %c0 = arith.constant 0 : index
    %c0_0 = arith.constant 0 : index
    %0 = vector.load %arg1[%c0, %c0_0] : memref<8x128xf32, #tpu.memory_space<vmem>>, vector<8x128xf32>
    %c0_1 = arith.constant 0 : index
    %c0_2 = arith.constant 0 : index
    %1 = vector.load %arg2[%c0_1, %c0_2] : memref<128x128xf32, #tpu.memory_space<vmem>>, vector<128x128xf32>
    %cst = arith.constant dense<0.000000e+00> : vector<8x128xf32>
    %2 = tpu.matmul %0, %1, %cst {dimension_numbers = #tpu.dot_dimension_numbers<[1], [0], [0], [1], [0, 0, 1, 1], [], []>} : vector<8x128xf32>, vector<128x128xf32>, vector<8x128xf32> -> vector<8x128xf32>
    %cst_3 = arith.constant 0.000000e+00 : f32
    %3 = vector.broadcast %cst_3 : f32 to vector<8x128xf32>
    %4 = arith.maximumf %2, %3 : vector<8x128xf32>
    %c0_4 = arith.constant 0 : index
    %c0_5 = arith.constant 0 : index
    %5 = vector.load %arg3[%c0_4, %c0_5] : memref<128x128xf32, #tpu.memory_space<vmem>>, vector<128x128xf32>
    %cst_6 = arith.constant dense<0.000000e+00> : vector<8x128xf32>
    %6 = tpu.matmul %4, %5, %cst_6 {dimension_numbers = #tpu.dot_dimension_numbers<[1], [0], [0], [1], [0, 0, 1, 1], [], []>} : vector<8x128xf32>, vector<128x128xf32>, vector<8x128xf32> -> vector<8x128xf32>
    %cst_7 = arith.constant 0.000000e+00 : f32
    %7 = vector.broadcast %cst_7 : f32 to vector<8x128xf32>
    %8 = arith.maximumf %6, %7 : vector<8x128xf32>
    %c0_8 = arith.constant 0 : index
    %c0_9 = arith.constant 0 : index
    %9 = vector.load %arg4[%c0_8, %c0_9] : memref<128x128xf32, #tpu.memory_space<vmem>>, vector<128x128xf32>
    %cst_10 = arith.constant dense<0.000000e+00> : vector<8x128xf32>
    %10 = tpu.matmul %8, %9, %cst_10 {dimension_numbers = #tpu.dot_dimension_numbers<[1], [0], [0], [1], [0, 0, 1, 1], [], []>} : vector<8x128xf32>, vector<128x128xf32>, vector<8x128xf32> -> vector<8x128xf32>
    %c0_11 = arith.constant 0 : index
    %c0_12 = arith.constant 0 : index
    %11 = vector.load %arg5[%c0_11, %c0_12] : memref<8x128xf32, #tpu.memory_space<vmem>>, vector<8x128xf32>
    tpu.vector_store %arg5[%c0_11, %c0_12], %10 {strides = array<i32>} : memref<8x128xf32, #tpu.memory_space<vmem>>, vector<8x128xf32>,
    return
  }
  func.func @transform_0(%arg0: i32) -> (i32, i32) {
    %c0_i32 = arith.constant 0 : i32
    %c0_i32_0 = arith.constant 0 : i32
    return %arg0, %c0_i32 : i32, i32
  }
  func.func @transform_1(%arg0: i32) -> (i32, i32) {
    %c0_i32 = arith.constant 0 : i32
    %c0_i32_0 = arith.constant 0 : i32
    %c0_i32_1 = arith.constant 0 : i32
    return %c0_i32, %c0_i32_0 : i32, i32
  }
  func.func @transform_2(%arg0: i32) -> (i32, i32) {
    %c0_i32 = arith.constant 0 : i32
    %c0_i32_0 = arith.constant 0 : i32
    %c0_i32_1 = arith.constant 0 : i32
    return %c0_i32, %c0_i32_0 : i32, i32
  }
  func.func @transform_3(%arg0: i32) -> (i32, i32) {
    %c0_i32 = arith.constant 0 : i32
    %c0_i32_0 = arith.constant 0 : i32
    %c0_i32_1 = arith.constant 0 : i32
    return %c0_i32, %c0_i32_0 : i32, i32
  }
  func.func @transform_4(%arg0: i32) -> (i32, i32) {
    %c0_i32 = arith.constant 0 : i32
    %c0_i32_0 = arith.constant 0 : i32
    return %arg0, %c0_i32 : i32, i32
  }
}

</mosaic_0001>

<llo_original>
// kernel: tpu_custom_call.1
$region0: #{tpu_custom_call.1}
  #allocation0 [shape = 'u32[]', space=smem, size = 0x4, offset = 0x4, fixed_abs, tag = 'smem constant byte address 0x4 - core index']
  #allocation1 [shape = 'u32[144,128]{1,0:T(1,128)}', space=vmem, size = 0x12000, scoped, tag = 'internal scratch']
  %s0 = inlined_call_operand.hbm [shape: f32[8,128], index: 0, kind: input, shape index: {}]
  %s1 = inlined_call_operand.hbm [shape: f32[128,128], index: 1, kind: input, shape index: {}]
  %s2 = inlined_call_operand.hbm [shape: f32[128,128], index: 2, kind: input, shape index: {}]
  %s3 = inlined_call_operand.hbm [shape: f32[128,128], index: 3, kind: input, shape index: {}]
  %s4 = inlined_call_operand.hbm [shape: f32[8,128], index: 4, kind: output, shape index: {}]
  %s5 = sld [smem:[#allocation0]]
  $region42: #{tpu_custom_call.1} parent=0
    _
  %s7 = ssub.s32 1, %s5
  %s8 = scalar_select 0, %s7, %s5
  $region1: #{tpu_custom_call.1} parent=0
    #allocation2 [shape = 'u8[4096]{0}', space=vmem, size = 0x1000, scoped, tag = 'input window, operand 0, single buffered']
    #allocation3 [shape = 's32[1]{0}', space=sflag, size = 0x4, scoped, tag = 'scoped memory for tpu_custom_call.1']
    #allocation4 [shape = 's32[1]{0}', space=sflag, size = 0x4, scoped, tag = 'scoped memory for tpu_custom_call.1']
    #allocation5 [shape = 'u8[65536]{0}', space=vmem, size = 0x10000, scoped, tag = 'input window, operand 1, single buffered']
    #allocation6 [shape = 's32[1]{0}', space=sflag, size = 0x4, scoped, tag = 'scoped memory for tpu_custom_call.1']
    #allocation7 [shape = 'u8[65536]{0}', space=vmem, size = 0x10000, scoped, tag = 'input window, operand 2, single buffered']
    #allocation8 [shape = 'u8[65536]{0}', space=vmem, size = 0x10000, scoped, tag = 'input window, operand 3, single buffered']
    #allocation9 [shape = 's32[1]{0}', space=sflag, size = 0x4, scoped, tag = 'scoped memory for tpu_custom_call.1']
    #allocation10 [shape = 'u8[4096]{0}', space=vmem, size = 0x1000, scoped, tag = 'output window, operand 0, single buffered']
    %9 = vsyncpa [#allocation3], 0
    %10 = vsyncpa [#allocation6], 0
    %11 = vsyncpa [#allocation9], 0
    %12 = vsyncpa [#allocation4], 0
    // Predicated region
    $region2: #{tpu_custom_call.1} parent=1 // pred_check
      _
    $region3: #{tpu_custom_call.1} parent=1 // pred_check_branch
      %14 = sbr.rel (0) target = $region5
    $region4: #{tpu_custom_call.1} parent=1 // pred_region
      %s16 = ssub.s32 128, 128
      %17 = vsyncadd [#allocation3], %s16
      %s19 = sshll.u32 [#allocation2], 4
      %s20 = int_to_ptr.vmem [resolvable:$true] %s19
      %22 = dma.hbm_to_vmem [thread:$0]  %s0, 128, %s20, [#allocation3]
    $region5: #{tpu_custom_call.1} parent=1 // pred_fallthru
      _
    // Predicated region
    $region6: #{tpu_custom_call.1} parent=1 // pred_check
      _
    $region7: #{tpu_custom_call.1} parent=1 // pred_check_branch
      %24 = sbr.rel (0) target = $region9
    $region8: #{tpu_custom_call.1} parent=1 // pred_region
      %s26 = ssub.s32 2048, 2048
      %27 = vsyncadd [#allocation6], %s26
      %s28 = sshll.u32 [#allocation5], 4
      %s29 = int_to_ptr.vmem [resolvable:$true] %s28
      %34 = dma.hbm_to_vmem [thread:$0]  %s1, 2048, %s29, [#allocation6], 128, 128, 8
    $region9: #{tpu_custom_call.1} parent=1 // pred_fallthru
      _
    // Predicated region
    $region10: #{tpu_custom_call.1} parent=1 // pred_check
      _
    $region11: #{tpu_custom_call.1} parent=1 // pred_check_branch
      %36 = sbr.rel (0) target = $region13
    $region12: #{tpu_custom_call.1} parent=1 // pred_region
      %s38 = ssub.s32 2048, 2048
      %39 = vsyncadd [#allocation6], %s38
      %s40 = sshll.u32 [#allocation7], 4
      %s41 = int_to_ptr.vmem [resolvable:$true] %s40
      %46 = dma.hbm_to_vmem [thread:$0]  %s2, 2048, %s41, [#allocation6], 128, 128, 8
    $region13: #{tpu_custom_call.1} parent=1 // pred_fallthru
      _
    // Predicated region
    $region14: #{tpu_custom_call.1} parent=1 // pred_check
      _
    $region15: #{tpu_custom_call.1} parent=1 // pred_check_branch
      %48 = sbr.rel (0) target = $region17
    $region16: #{tpu_custom_call.1} parent=1 // pred_region
      %s50 = ssub.s32 2048, 2048
      %51 = vsyncadd [#allocation9], %s50
      %s52 = sshll.u32 [#allocation8], 4
      %s53 = int_to_ptr.vmem [resolvable:$true] %s52
      %58 = dma.hbm_to_vmem [thread:$0]  %s3, 2048, %s53, [#allocation9], 128, 128, 8
    $region17: #{tpu_custom_call.1} parent=1 // pred_fallthru
      _
    // Predicated region
    $region18: #{tpu_custom_call.1} parent=1 // pred_check
      _
    $region19: #{tpu_custom_call.1} parent=1 // pred_check_branch
      %60 = sbr.rel (0) target = $region21
    $region20: #{tpu_custom_call.1} parent=1 // pred_region
      %61 = dma.done [#allocation3], 128
    $region21: #{tpu_custom_call.1} parent=1 // pred_fallthru
      _
    // Predicated region
    $region22: #{tpu_custom_call.1} parent=1 // pred_check
      _
    $region23: #{tpu_custom_call.1} parent=1 // pred_check_branch
      %63 = sbr.rel (0) target = $region25
    $region24: #{tpu_custom_call.1} parent=1 // pred_region
      %64 = dma.done [#allocation6], 2048
    $region25: #{tpu_custom_call.1} parent=1 // pred_fallthru
      _
    // Predicated region
    $region26: #{tpu_custom_call.1} parent=1 // pred_check
      _
    $region27: #{tpu_custom_call.1} parent=1 // pred_check_branch
      %66 = sbr.rel (0) target = $region29
    $region28: #{tpu_custom_call.1} parent=1 // pred_region
      %67 = dma.done [#allocation6], 2048
    $region29: #{tpu_custom_call.1} parent=1 // pred_fallthru
      _
    // Predicated region
    $region30: #{tpu_custom_call.1} parent=1 // pred_check
      _
    $region31: #{tpu_custom_call.1} parent=1 // pred_check_branch
      %69 = sbr.rel (0) target = $region33
    $region32: #{tpu_custom_call.1} parent=1 // pred_region
      %70 = dma.done [#allocation9], 2048
    $region33: #{tpu_custom_call.1} parent=1 // pred_fallthru
      _
    %v71 = vld [vmem:[#allocation2] sm:$0xff]
    %v72 = vld [vmem:[#allocation5] sm:$0xff]
    %v73 = vld [vmem:[#allocation5 + $0x8] sm:$0xff]
    %v74 = vld [vmem:[#allocation5 + $0x10] sm:$0xff]
    %v75 = vld [vmem:[#allocation5 + $0x18] sm:$0xff]
    %v76 = vld [vmem:[#allocation5 + $0x20] sm:$0xff]
    %v77 = vld [vmem:[#allocation5 + $0x28] sm:$0xff]
    %v78 = vld [vmem:[#allocation5 + $0x30] sm:$0xff]
    %v79 = vld [vmem:[#allocation5 + $0x38] sm:$0xff]
    %v80 = vld [vmem:[#allocation5 + $0x40] sm:$0xff]
    %v81 = vld [vmem:[#allocation5 + $0x48] sm:$0xff]
    %v82 = vld [vmem:[#allocation5 + $0x50] sm:$0xff]
    %v83 = vld [vmem:[#allocation5 + $0x58] sm:$0xff]
    %v84 = vld [vmem:[#allocation5 + $0x60] sm:$0xff]
    %v85 = vld [vmem:[#allocation5 + $0x68] sm:$0xff]
    %v86 = vld [vmem:[#allocation5 + $0x70] sm:$0xff]
    %v87 = vld [vmem:[#allocation5 + $0x78] sm:$0xff]
    %88 = vmatprep.subr.mxu0 0.0
    %89 = vmatpush1.msra.mxu0 %v72
    %90 = vmatprep.subr.mxu0 0.0
    %91 = vmatpush1.msra.mxu0 %v73
    %92 = vmatprep.subr.mxu0 0.0
    %93 = vmatpush1.msra.mxu0 %v74
    %94 = vmatprep.subr.mxu0 0.0
    %95 = vmatpush1.msra.mxu0 %v75
    %96 = vmatprep.subr.mxu0 0.0
    %97 = vmatpush1.msra.mxu0 %v76
    %98 = vmatprep.subr.mxu0 0.0
    %99 = vmatpush1.msra.mxu0 %v77
    %100 = vmatprep.subr.mxu0 0.0
    %101 = vmatpush1.msra.mxu0 %v78
    %102 = vmatprep.subr.mxu0 0.0
    %103 = vmatpush1.msra.mxu0 %v79
    %104 = vmatprep.subr.mxu0 0.0
    %105 = vmatpush1.msra.mxu0 %v80
    %106 = vmatprep.subr.mxu0 0.0
    %107 = vmatpush1.msra.mxu0 %v81
    %108 = vmatprep.subr.mxu0 0.0
    %109 = vmatpush1.msra.mxu0 %v82
    %110 = vmatprep.subr.mxu0 0.0
    %111 = vmatpush1.msra.mxu0 %v83
    %112 = vmatprep.subr.mxu0 0.0
    %113 = vmatpush1.msra.mxu0 %v84
    %114 = vmatprep.subr.mxu0 0.0
    %115 = vmatpush1.msra.mxu0 %v85
    %116 = vmatprep.subr.mxu0 0.0
    %117 = vmatpush1.msra.mxu0 %v86
    %118 = vmatprep.subr.mxu0 0.0
    %119 = vmatpush1.msra.mxu0 %v87
    %120 = vmatprep.subr.mxu0 0.0
    %121 = vmatpush1.msra.mxu0 0.0
    %122 = vmatprep.subr.mxu0 0.0
    %123 = vmatpush1.msra.mxu0 0.0
    %124 = vmatprep.subr.mxu0 0.0
    %125 = vmatpush1.msra.mxu0 0.0
    %126 = vmatprep.subr.mxu0 0.0
    %127 = vmatpush1.msra.mxu0 0.0
    %128 = vmatprep.subr.mxu0 0.0
    %129 = vmatpush1.msra.mxu0 0.0
    %130 = vmatprep.subr.mxu0 0.0
    %131 = vmatpush1.msra.mxu0 0.0
    %132 = vmatprep.subr.mxu0 0.0
    %133 = vmatpush1.msra.mxu0 0.0
    %134 = vmatprep.subr.mxu0 0.0
    %135 = vmatpush1.msra.mxu0 0.0
    %136 = vmatprep.subr.mxu0 0.0
    %137 = vmatpush1.msra.mxu0 0.0
    %138 = vmatprep.subr.mxu0 0.0
    %139 = vmatpush1.msra.mxu0 0.0
    %140 = vmatprep.subr.mxu0 0.0
    %141 = vmatpush1.msra.mxu0 0.0
    %142 = vmatprep.subr.mxu0 0.0
    %143 = vmatpush1.msra.mxu0 0.0
    %144 = vmatprep.subr.mxu0 0.0
    %145 = vmatpush1.msra.mxu0 0.0
    %146 = vmatprep.subr.mxu0 0.0
    %147 = vmatpush1.msra.mxu0 0.0
    %148 = vmatprep.subr.mxu0 0.0
    %149 = vmatpush1.msra.mxu0 0.0
    %150 = vmatprep.subr.mxu0 0.0
    %151 = vmatpush1.msra.mxu0 0.0
    %152 = vmatprep.mubr.f32.mxu0 0.0
    %153 = vmatmul.mubr.f32.gmra.mrb[0].mxu0 %v71
    %v154 = vpop.f32.mrb[0].mxu0
    %v155 = vadd.f32 0.0, %v154
    %v156 = vpop.f32.mrb[0].mxu0
    %157 = vdwg.mxu0
    %v158 = vmax.f32 %v155, 0.0
    %v159 = vld [vmem:[#allocation7] sm:$0xff]
    %v160 = vld [vmem:[#allocation7 + $0x8] sm:$0xff]
    %v161 = vld [vmem:[#allocation7 + $0x10] sm:$0xff]
    %v162 = vld [vmem:[#allocation7 + $0x18] sm:$0xff]
    %v163 = vld [vmem:[#allocation7 + $0x20] sm:$0xff]
    %v164 = vld [vmem:[#allocation7 + $0x28] sm:$0xff]
    %v165 = vld [vmem:[#allocation7 + $0x30] sm:$0xff]
    %v166 = vld [vmem:[#allocation7 + $0x38] sm:$0xff]
    %v167 = vld [vmem:[#allocation7 + $0x40] sm:$0xff]
    %v168 = vld [vmem:[#allocation7 + $0x48] sm:$0xff]
    %v169 = vld [vmem:[#allocation7 + $0x50] sm:$0xff]
    %v170 = vld [vmem:[#allocation7 + $0x58] sm:$0xff]
    %v171 = vld [vmem:[#allocation7 + $0x60] sm:$0xff]
    %v172 = vld [vmem:[#allocation7 + $0x68] sm:$0xff]
    %v173 = vld [vmem:[#allocation7 + $0x70] sm:$0xff]
    %v174 = vld [vmem:[#allocation7 + $0x78] sm:$0xff]
    %175 = vmatprep.subr.mxu0 0.0
    %176 = vmatpush1.msra.mxu0 %v159
    %177 = vmatprep.subr.mxu0 0.0
    %178 = vmatpush1.msra.mxu0 %v160
    %179 = vmatprep.subr.mxu0 0.0
    %180 = vmatpush1.msra.mxu0 %v161
    %181 = vmatprep.subr.mxu0 0.0
    %182 = vmatpush1.msra.mxu0 %v162
    %183 = vmatprep.subr.mxu0 0.0
    %184 = vmatpush1.msra.mxu0 %v163
    %185 = vmatprep.subr.mxu0 0.0
    %186 = vmatpush1.msra.mxu0 %v164
    %187 = vmatprep.subr.mxu0 0.0
    %188 = vmatpush1.msra.mxu0 %v165
    %189 = vmatprep.subr.mxu0 0.0
    %190 = vmatpush1.msra.mxu0 %v166
    %191 = vmatprep.subr.mxu0 0.0
    %192 = vmatpush1.msra.mxu0 %v167
    %193 = vmatprep.subr.mxu0 0.0
    %194 = vmatpush1.msra.mxu0 %v168
    %195 = vmatprep.subr.mxu0 0.0
    %196 = vmatpush1.msra.mxu0 %v169
    %197 = vmatprep.subr.mxu0 0.0
    %198 = vmatpush1.msra.mxu0 %v170
    %199 = vmatprep.subr.mxu0 0.0
    %200 = vmatpush1.msra.mxu0 %v171
    %201 = vmatprep.subr.mxu0 0.0
    %202 = vmatpush1.msra.mxu0 %v172
    %203 = vmatprep.subr.mxu0 0.0
    %204 = vmatpush1.msra.mxu0 %v173
    %205 = vmatprep.subr.mxu0 0.0
    %206 = vmatpush1.msra.mxu0 %v174
    %207 = vmatprep.subr.mxu0 0.0
    %208 = vmatpush1.msra.mxu0 0.0
    %209 = vmatprep.subr.mxu0 0.0
    %210 = vmatpush1.msra.mxu0 0.0
    %211 = vmatprep.subr.mxu0 0.0
    %212 = vmatpush1.msra.mxu0 0.0
    %213 = vmatprep.subr.mxu0 0.0
    %214 = vmatpush1.msra.mxu0 0.0
    %215 = vmatprep.subr.mxu0 0.0
    %216 = vmatpush1.msra.mxu0 0.0
    %217 = vmatprep.subr.mxu0 0.0
    %218 = vmatpush1.msra.mxu0 0.0
    %219 = vmatprep.subr.mxu0 0.0
    %220 = vmatpush1.msra.mxu0 0.0
    %221 = vmatprep.subr.mxu0 0.0
    %222 = vmatpush1.msra.mxu0 0.0
    %223 = vmatprep.subr.mxu0 0.0
    %224 = vmatpush1.msra.mxu0 0.0
    %225 = vmatprep.subr.mxu0 0.0
    %226 = vmatpush1.msra.mxu0 0.0
    %227 = vmatprep.subr.mxu0 0.0
    %228 = vmatpush1.msra.mxu0 0.0
    %229 = vmatprep.subr.mxu0 0.0
    %230 = vmatpush1.msra.mxu0 0.0
    %231 = vmatprep.subr.mxu0 0.0
    %232 = vmatpush1.msra.mxu0 0.0
    %233 = vmatprep.subr.mxu0 0.0
    %234 = vmatpush1.msra.mxu0 0.0
    %235 = vmatprep.subr.mxu0 0.0
    %236 = vmatpush1.msra.mxu0 0.0
    %237 = vmatprep.subr.mxu0 0.0
    %238 = vmatpush1.msra.mxu0 0.0
    %239 = vmatprep.mubr.f32.mxu0 0.0
    %240 = vmatmul.mubr.f32.gmra.mrb[0].mxu0 %v158
    %v241 = vpop.f32.mrb[0].mxu0
    %v242 = vadd.f32 0.0, %v241
    %v243 = vpop.f32.mrb[0].mxu0
    %244 = vdwg.mxu0
    %v245 = vmax.f32 %v242, 0.0
    %v246 = vld [vmem:[#allocation8] sm:$0xff]
    %v247 = vld [vmem:[#allocation8 + $0x8] sm:$0xff]
    %v248 = vld [vmem:[#allocation8 + $0x10] sm:$0xff]
    %v249 = vld [vmem:[#allocation8 + $0x18] sm:$0xff]
    %v250 = vld [vmem:[#allocation8 + $0x20] sm:$0xff]
    %v251 = vld [vmem:[#allocation8 + $0x28] sm:$0xff]
    %v252 = vld [vmem:[#allocation8 + $0x30] sm:$0xff]
    %v253 = vld [vmem:[#allocation8 + $0x38] sm:$0xff]
    %v254 = vld [vmem:[#allocation8 + $0x40] sm:$0xff]
    %v255 = vld [vmem:[#allocation8 + $0x48] sm:$0xff]
    %v256 = vld [vmem:[#allocation8 + $0x50] sm:$0xff]
    %v257 = vld [vmem:[#allocation8 + $0x58] sm:$0xff]
    %v258 = vld [vmem:[#allocation8 + $0x60] sm:$0xff]
    %v259 = vld [vmem:[#allocation8 + $0x68] sm:$0xff]
    %v260 = vld [vmem:[#allocation8 + $0x70] sm:$0xff]
    %v261 = vld [vmem:[#allocation8 + $0x78] sm:$0xff]
    %262 = vmatprep.subr.mxu0 0.0
    %263 = vmatpush1.msra.mxu0 %v246
    %264 = vmatprep.subr.mxu0 0.0
    %265 = vmatpush1.msra.mxu0 %v247
    %266 = vmatprep.subr.mxu0 0.0
    %267 = vmatpush1.msra.mxu0 %v248
    %268 = vmatprep.subr.mxu0 0.0
    %269 = vmatpush1.msra.mxu0 %v249
    %270 = vmatprep.subr.mxu0 0.0
    %271 = vmatpush1.msra.mxu0 %v250
    %272 = vmatprep.subr.mxu0 0.0
    %273 = vmatpush1.msra.mxu0 %v251
    %274 = vmatprep.subr.mxu0 0.0
    %275 = vmatpush1.msra.mxu0 %v252
    %276 = vmatprep.subr.mxu0 0.0
    %277 = vmatpush1.msra.mxu0 %v253
    %278 = vmatprep.subr.mxu0 0.0
    %279 = vmatpush1.msra.mxu0 %v254
    %280 = vmatprep.subr.mxu0 0.0
    %281 = vmatpush1.msra.mxu0 %v255
    %282 = vmatprep.subr.mxu0 0.0
    %283 = vmatpush1.msra.mxu0 %v256
    %284 = vmatprep.subr.mxu0 0.0
    %285 = vmatpush1.msra.mxu0 %v257
    %286 = vmatprep.subr.mxu0 0.0
    %287 = vmatpush1.msra.mxu0 %v258
    %288 = vmatprep.subr.mxu0 0.0
    %289 = vmatpush1.msra.mxu0 %v259
    %290 = vmatprep.subr.mxu0 0.0
    %291 = vmatpush1.msra.mxu0 %v260
    %292 = vmatprep.subr.mxu0 0.0
    %293 = vmatpush1.msra.mxu0 %v261
    %294 = vmatprep.subr.mxu0 0.0
    %295 = vmatpush1.msra.mxu0 0.0
    %296 = vmatprep.subr.mxu0 0.0
    %297 = vmatpush1.msra.mxu0 0.0
    %298 = vmatprep.subr.mxu0 0.0
    %299 = vmatpush1.msra.mxu0 0.0
    %300 = vmatprep.subr.mxu0 0.0
    %301 = vmatpush1.msra.mxu0 0.0
    %302 = vmatprep.subr.mxu0 0.0
    %303 = vmatpush1.msra.mxu0 0.0
    %304 = vmatprep.subr.mxu0 0.0
    %305 = vmatpush1.msra.mxu0 0.0
    %306 = vmatprep.subr.mxu0 0.0
    %307 = vmatpush1.msra.mxu0 0.0
    %308 = vmatprep.subr.mxu0 0.0
    %309 = vmatpush1.msra.mxu0 0.0
    %310 = vmatprep.subr.mxu0 0.0
    %311 = vmatpush1.msra.mxu0 0.0
    %312 = vmatprep.subr.mxu0 0.0
    %313 = vmatpush1.msra.mxu0 0.0
    %314 = vmatprep.subr.mxu0 0.0
    %315 = vmatpush1.msra.mxu0 0.0
    %316 = vmatprep.subr.mxu0 0.0
    %317 = vmatpush1.msra.mxu0 0.0
    %318 = vmatprep.subr.mxu0 0.0
    %319 = vmatpush1.msra.mxu0 0.0
    %320 = vmatprep.subr.mxu0 0.0
    %321 = vmatpush1.msra.mxu0 0.0
    %322 = vmatprep.subr.mxu0 0.0
    %323 = vmatpush1.msra.mxu0 0.0
    %324 = vmatprep.subr.mxu0 0.0
    %325 = vmatpush1.msra.mxu0 0.0
    %326 = vmatprep.mubr.f32.mxu0 0.0
    %327 = vmatmul.mubr.f32.gmra.mrb[0].mxu0 %v245
    %v328 = vpop.f32.mrb[0].mxu0
    %v329 = vadd.f32 0.0, %v328
    %v330 = vpop.f32.mrb[0].mxu0
    %331 = vdwg.mxu0
    %332 = vst [vmem:[#allocation10] sm:$0xff] %v329
    // Predicated region
    $region34: #{tpu_custom_call.1} parent=1 // pred_check
      _
    $region35: #{tpu_custom_call.1} parent=1 // pred_check_branch
      %334 = sbr.rel (0) target = $region37
    $region36: #{tpu_custom_call.1} parent=1 // pred_region
      %s336 = ssub.s32 128, 128
      %337 = vsyncadd [#allocation4], %s336
      %s339 = sshll.u32 [#allocation10], 4
      %s340 = int_to_ptr.vmem [resolvable:$true] %s339
      %342 = dma.vmem_to_hbm [thread:$0]  %s340, 128, %s4, [#allocation4]
    $region37: #{tpu_custom_call.1} parent=1 // pred_fallthru
      _
    // Predicated region
    $region38: #{tpu_custom_call.1} parent=1 // pred_check
      _
    $region39: #{tpu_custom_call.1} parent=1 // pred_check_branch
      %344 = sbr.rel (0) target = $region41
    $region40: #{tpu_custom_call.1} parent=1 // pred_region
      %345 = dma.done [#allocation4], 128
    $region41: #{tpu_custom_call.1} parent=1 // pred_fallthru
      _
    %346 = vsyncpa [#allocation3], 1
    %347 = vsyncpa [#allocation6], 1
    %348 = vsyncpa [#allocation9], 1
    %349 = vsyncpa [#allocation4], 1

</llo_original>
